<compile_context>
chip_gen: v7x
topology: tpu7x:2x2x1
jax: 0.10.0
libtpu: 0.0.40
codegen_flags: <defaults>
</compile_context>

<pallas_src>
import functools

import jax
import jax.numpy as jnp
from jax.experimental import pallas as pl
from jax.experimental.pallas import tpu as pltpu

_LANES = 128
_SUBLANES = 8
_ALIGN = _LANES * _SUBLANES  # 1024 elements


def _cdiv(a, b):
    return (a + b - 1) // b


def _chip_config():
    """Return (num_splits, block_bytes_per_input) keyed off the TPU generation."""
    try:
        kind = jax.devices()[0].device_kind.lower()
    except Exception:  # pragma: no cover - defensive
        kind = ""
    if "v7" in kind:
        # 2 TensorCores/chip, 3.2 TB/s HBM: 4 MiB blocks -> 16 MiB of buffers,
        # well inside the 32 MiB default scoped VMEM (64 MiB physical).
        return 2, 4 * 1024 * 1024
    if "v6" in kind:
        # single TC, 32 MiB default scoped VMEM.
        return 1, 4 * 1024 * 1024
    # v5e / unknown: 16 MiB default scoped VMEM -> 2 MiB blocks (8 MiB buffers).
    return 1, 2 * 1024 * 1024


def _sq_diff_sum_kernel(yhat_ref, y_ref, out_ref, acc_ref, *,
                        rows, block_rows, steps, masked):
    """Accumulate sum((yhat - y)^2) into an (8, 128) VMEM accumulator.

    grid = (num_splits, steps): axis 0 shards across TensorCores (v7x only),
    axis 1 is the sequential reduction axis.  Each split writes its own
    (8, 128) partial-sum block; the wrapper does the final cross-lane reduce.
    """
    c = pl.program_id(0)
    s = pl.program_id(1)

    @pl.when(s == 0)
    def _():
        acc_ref[...] = jnp.zeros_like(acc_ref)

    # Widen to f32 inside the kernel (inputs stay in native dtype in HBM).
    d = yhat_ref[...].astype(jnp.float32) - y_ref[...].astype(jnp.float32)
    sq = d * d

    # Global (logical) block index for this step.  The index_map clamps the
    # DMA to the last in-bounds block, so duplicated / partially-OOB blocks
    # are handled purely by masking here.
    g = c * steps + s

    if masked:
        full_block = (g + 1) * block_rows <= rows

        @pl.when(full_block)
        def _():
            acc_ref[...] += sq.reshape(-1, _SUBLANES, _LANES).sum(axis=0)

        @pl.when(jnp.logical_not(full_block))
        def _():
            row_idx = g * block_rows + jax.lax.broadcasted_iota(
                jnp.int32, sq.shape, 0)
            sq_m = jnp.where(row_idx < rows, sq, 0.0)
            acc_ref[...] += sq_m.reshape(-1, _SUBLANES, _LANES).sum(axis=0)
    else:
        acc_ref[...] += sq.reshape(-1, _SUBLANES, _LANES).sum(axis=0)

    @pl.when(s == steps - 1)
    def _():
        out_ref[...] = acc_ref[...]


def _aligned_sq_diff_sum(yhat_2d, y_2d, rows, num_splits, block_bytes):
    """Pallas sum of squared differences over a (rows, 128) view, rows % 8 == 0."""
    itemsize = max(yhat_2d.dtype.itemsize, y_2d.dtype.itemsize)
    budget_rows = (block_bytes // (_LANES * itemsize)) // _SUBLANES * _SUBLANES
    budget_rows = max(budget_rows, _SUBLANES)
    block_rows = min(budget_rows, rows)          # rows is a multiple of 8

    blocks_total = _cdiv(rows, block_rows)
    steps = _cdiv(blocks_total, num_splits)
    masked = (num_splits * steps * block_rows != rows)

    def in_map(c, s):
        # Clamp so the DMA never starts past the end of the array; the kernel
        # masks the logically out-of-range rows to zero.
        return (jnp.minimum(c * steps + s, blocks_total - 1), 0)

    kernel = functools.partial(
        _sq_diff_sum_kernel, rows=rows, block_rows=block_rows,
        steps=steps, masked=masked)

    if num_splits > 1:
        # Only CORE_PARALLEL actually shards the grid axis across TensorCores.
        dim_sem = (pltpu.CORE_PARALLEL, pltpu.ARBITRARY)
    else:
        dim_sem = ("parallel", "arbitrary")

    partials = pl.pallas_call(
        kernel,
        out_shape=jax.ShapeDtypeStruct((num_splits * _SUBLANES, _LANES),
                                       jnp.float32),
        grid_spec=pltpu.PrefetchScalarGridSpec(
            num_scalar_prefetch=0,
            grid=(num_splits, steps),
            in_specs=[
                pl.BlockSpec((block_rows, _LANES), in_map),
                pl.BlockSpec((block_rows, _LANES), in_map),
            ],
            # Each split owns one tile-aligned (8, 128) partial-sum block.
            out_specs=pl.BlockSpec((_SUBLANES, _LANES), lambda c, s: (c, 0)),
            scratch_shapes=[pltpu.VMEM((_SUBLANES, _LANES), jnp.float32)],
        ),
        compiler_params=pltpu.CompilerParams(dimension_semantics=dim_sem),
    )(yhat_2d, y_2d)

    return jnp.sum(partials, dtype=jnp.float32)


@jax.jit
def _mse_pallas(yhat, y):
    """MSE over equally-shaped arrays; hot path in Pallas."""
    assert yhat.shape == y.shape, (yhat.shape, y.shape)
    n = yhat.size
    if n == 0:
        # mean over zero elements (matches torch's NaN semantics)
        return jnp.float32(jnp.nan)

    num_splits, block_bytes = _chip_config()

    # Keep native dtype in HBM (halves traffic for bf16 inputs); flatten.
    yhat_f = jnp.ravel(yhat)
    y_f = jnp.ravel(y)

    # Kernel handles the (8*128)-aligned prefix (no padding copy needed for
    # aligned sizes); the <1024-element remainder is summed in plain JAX.
    n_main = (n // _ALIGN) * _ALIGN

    total = jnp.float32(0.0)
    if n_main > 0:
        rows = n_main // _LANES                  # multiple of 8
        yhat_2d = yhat_f[:n_main].reshape(rows, _LANES)
        y_2d = y_f[:n_main].reshape(rows, _LANES)
        total = total + _aligned_sq_diff_sum(yhat_2d, y_2d, rows,
                                             num_splits, block_bytes)
    if n_main < n:
        dr = (yhat_f[n_main:].astype(jnp.float32)
              - y_f[n_main:].astype(jnp.float32))
        total = total + jnp.sum(dr * dr, dtype=jnp.float32)

    return (total / jnp.float32(n)).astype(jnp.float32)


class BaseLossPallas:
    """JAX/Pallas port of BaseLoss with an MSE `loss_fn` (hot path in Pallas)."""

    def __init__(self, device=None):
        self.device = device  # kept for API parity; JAX manages placement

    def __call__(self, yhat, y):
        return self.forward(yhat, y)

    def forward(self, yhat, y):
        y = self._format(y, yhat)
        yhat = self._format(yhat, is_yhat=True)
        return self.loss(yhat, y)

    def _format(self, data, yhat=None, is_yhat=False):
        data = [data] if not isinstance(data, list) else data
        formatter = self._format_single_yhat if is_yhat else self._format_single_y
        data = [formatter(d, yhat) for d in data]
        return data[0] if len(data) == 1 else data

    @staticmethod
    def _format_single_y(y, yhat):
        y = jnp.asarray(y)
        return y.reshape(-1, 1) if y.ndim == 1 else y

    @staticmethod
    def _format_single_yhat(yhat, _):
        yhat = jnp.asarray(yhat)
        return yhat.reshape(-1, 1) if yhat.ndim == 1 else yhat

    def loss(self, yhat, y):
        # TODO(synk): BaseLoss is abstract (loss_fn comes from subclasses); the
        # torch int-target fallback (`y.squeeze().long()`) is not applicable to
        # the concrete MSE loss_fn supplied here.
        return self.loss_fn(yhat, y)

    @staticmethod
    def loss_fn(yhat, y):
        return _mse_pallas(yhat, y)


if __name__ == "__main__":
    key = jax.random.PRNGKey(0)
    k1, k2, k3, k4, k5, k6 = jax.random.split(key, 6)

    loss_mod = BaseLossPallas()

    # 1) 1-D regression targets, (8*128)-aligned (kernel-only path; formatted
    #    to (n, 1) like the PyTorch module).
    n = 2048
    yhat = jax.random.normal(k1, (n,), dtype=jnp.float32)
    y = jax.random.normal(k2, (n,), dtype=jnp.float32)
    out = jax.block_until_ready(loss_mod(yhat, y))
    ref = jnp.mean((yhat.reshape(-1, 1) - y.reshape(-1, 1)) ** 2)
    assert jnp.allclose(out, ref, rtol=1e-5, atol=1e-6), (out, ref)

    # 2) 2-D, unaligned size > 1024 (kernel on the aligned prefix + plain-JAX
    #    remainder).
    yhat2 = jax.random.normal(k3, (3, 700), dtype=jnp.float32)
    y2 = jax.random.normal(k4, (3, 700), dtype=jnp.float32)
    out2 = jax.block_until_ready(loss_mod(yhat2, y2))
    ref2 = jnp.mean((yhat2 - y2) ** 2)
    assert jnp.allclose(out2, ref2, rtol=1e-5, atol=1e-6), (out2, ref2)

    # 3) small unaligned 2-D case (< 1024 elements: pure-JAX remainder path).
    yhat3 = jax.random.normal(k5, (4, 37), dtype=jnp.float32)
    y3 = jax.random.normal(k6, (4, 37), dtype=jnp.float32)
    out3 = jax.block_until_ready(loss_mod(yhat3, y3))
    ref3 = jnp.mean((yhat3 - y3) ** 2)
    assert jnp.allclose(out3, ref3, rtol=1e-5, atol=1e-6), (out3, ref3)

    # 4) bf16 inputs stay bf16 in HBM, widened to f32 inside the kernel.
    yhat4 = jax.random.normal(k1, (8, 256), dtype=jnp.bfloat16)
    y4 = jax.random.normal(k2, (8, 256), dtype=jnp.bfloat16)
    out4 = jax.block_until_ready(loss_mod(yhat4, y4))
    ref4 = jnp.mean((yhat4.astype(jnp.float32) - y4.astype(jnp.float32)) ** 2)
    assert jnp.allclose(out4, ref4, rtol=1e-4, atol=1e-5), (out4, ref4)

    print("KERNEL_OK")
</pallas_src>

<mosaic_0001>
module attributes {stable_mosaic.version = 11 : i64} {
  func.func @_sq_diff_sum_kernel(%arg0: i32, %arg1: i32, %arg2: memref<16x128xf32, #tpu.memory_space<vmem>>, %arg3: memref<16x128xf32, #tpu.memory_space<vmem>>, %arg4: memref<8x128xf32, #tpu.memory_space<vmem>>, %arg5: memref<8x128xf32, #tpu.memory_space<vmem>>) attributes {dimension_semantics = [#tpu.dimension_semantics<parallel>, #tpu.dimension_semantics<arbitrary>], iteration_bounds = array<i64: 1, 1>, scalar_prefetch = 0 : i64, scratch_operands = 1 : i64, tpu.core_type = #tpu.core_type<tc>, window_params = [{transform_indices = @transform_0, window_bounds = array<i64: 16, 128>}, {transform_indices = @transform_1, window_bounds = array<i64: 16, 128>}, {transform_indices = @transform_2, window_bounds = array<i64: 8, 128>}]} {
    %c0_i32 = arith.constant 0 : i32
    %0 = arith.cmpi eq, %arg1, %c0_i32 : i32
    %1 = arith.extui %0 : i1 to i32
    %c0_i32_0 = arith.constant 0 : i32
    %2 = arith.cmpi ne, %1, %c0_i32_0 : i32
    scf.if %2 {
      %cst_10 = arith.constant 0.000000e+00 : f32
      %15 = vector.broadcast %cst_10 : f32 to vector<8x128xf32>
      %c0_11 = arith.constant 0 : index
      %c0_12 = arith.constant 0 : index
      %16 = vector.load %arg5[%c0_11, %c0_12] : memref<8x128xf32, #tpu.memory_space<vmem>>, vector<8x128xf32>
      tpu.vector_store %arg5[%c0_11, %c0_12], %15 {strides = array<i32>} : memref<8x128xf32, #tpu.memory_space<vmem>>, vector<8x128xf32>,
    } else {
    }
    %c0 = arith.constant 0 : index
    %c0_1 = arith.constant 0 : index
    %3 = vector.load %arg2[%c0, %c0_1] : memref<16x128xf32, #tpu.memory_space<vmem>>, vector<16x128xf32>
    %c0_2 = arith.constant 0 : index
    %c0_3 = arith.constant 0 : index
    %4 = vector.load %arg3[%c0_2, %c0_3] : memref<16x128xf32, #tpu.memory_space<vmem>>, vector<16x128xf32>
    %5 = arith.subf %3, %4 : vector<16x128xf32>
    %6 = arith.mulf %5, %5 : vector<16x128xf32>
    %c0_4 = arith.constant 0 : index
    %c0_5 = arith.constant 0 : index
    %7 = vector.load %arg5[%c0_4, %c0_5] : memref<8x128xf32, #tpu.memory_space<vmem>>, vector<8x128xf32>
    %8 = vector.shape_cast %6 : vector<16x128xf32> to vector<2x8x128xf32>
    %cst = arith.constant dense<0.000000e+00> : vector<8x128xf32>
    %9 = vector.multi_reduction <add>, %8, %cst [0] : vector<2x8x128xf32> to vector<8x128xf32>
    %10 = arith.addf %7, %9 : vector<8x128xf32>
    %c0_6 = arith.constant 0 : index
    %c0_7 = arith.constant 0 : index
    %11 = vector.load %arg5[%c0_6, %c0_7] : memref<8x128xf32, #tpu.memory_space<vmem>>, vector<8x128xf32>
    tpu.vector_store %arg5[%c0_6, %c0_7], %10 {strides = array<i32>} : memref<8x128xf32, #tpu.memory_space<vmem>>, vector<8x128xf32>,
    %c0_i32_8 = arith.constant 0 : i32
    %12 = arith.cmpi eq, %arg1, %c0_i32_8 : i32
    %13 = arith.extui %12 : i1 to i32
    %c0_i32_9 = arith.constant 0 : i32
    %14 = arith.cmpi ne, %13, %c0_i32_9 : i32
    scf.if %14 {
      %c0_10 = arith.constant 0 : index
      %c0_11 = arith.constant 0 : index
      %15 = vector.load %arg5[%c0_10, %c0_11] : memref<8x128xf32, #tpu.memory_space<vmem>>, vector<8x128xf32>
      %c0_12 = arith.constant 0 : index
      %c0_13 = arith.constant 0 : index
      %16 = vector.load %arg4[%c0_12, %c0_13] : memref<8x128xf32, #tpu.memory_space<vmem>>, vector<8x128xf32>
      tpu.vector_store %arg4[%c0_12, %c0_13], %15 {strides = array<i32>} : memref<8x128xf32, #tpu.memory_space<vmem>>, vector<8x128xf32>,
    } else {
    }
    return
  }
  func.func @transform_0(%arg0: i32, %arg1: i32) -> (i32, i32) {
    %c1_i32 = arith.constant 1 : i32
    %0 = arith.muli %arg0, %c1_i32 : i32
    %1 = arith.addi %0, %arg1 : i32
    %c0_i32 = arith.constant 0 : i32
    %2 = arith.minsi %1, %c0_i32 : i32
    %c0_i32_0 = arith.constant 0 : i32
    %c0_i32_1 = arith.constant 0 : i32
    return %2, %c0_i32_0 : i32, i32
  }
  func.func @transform_1(%arg0: i32, %arg1: i32) -> (i32, i32) {
    %c1_i32 = arith.constant 1 : i32
    %0 = arith.muli %arg0, %c1_i32 : i32
    %1 = arith.addi %0, %arg1 : i32
    %c0_i32 = arith.constant 0 : i32
    %2 = arith.minsi %1, %c0_i32 : i32
    %c0_i32_0 = arith.constant 0 : i32
    %c0_i32_1 = arith.constant 0 : i32
    return %2, %c0_i32_0 : i32, i32
  }
  func.func @transform_2(%arg0: i32, %arg1: i32) -> (i32, i32) {
    %c0_i32 = arith.constant 0 : i32
    %c0_i32_0 = arith.constant 0 : i32
    return %arg0, %c0_i32 : i32, i32
  }
}

</mosaic_0001>

<llo_original>
// kernel: _mse_pallas.1
$region0: #{_mse_pallas.1}
  #allocation0 [shape = 'u32[]', space=smem, size = 0x4, offset = 0x4, fixed_abs, tag = 'smem constant byte address 0x4 - core index']
  #allocation1 [shape = 'u32[144,128]{1,0:T(1,128)}', space=vmem, size = 0x12000, scoped, tag = 'internal scratch']
  #allocation2 [shape = 'f32[8,128]{1,0:T(8,128)}', space=vmem, size = 0x1000, scoped, tag = 'scratch operand']
  %s0 = inlined_call_operand.hbm [shape: f32[16,128], index: 0, kind: input, shape index: {}]
  %s1 = inlined_call_operand.hbm [shape: f32[16,128], index: 1, kind: input, shape index: {}]
  %s2 = inlined_call_operand.vmem [shape: f32[8,128], index: 2, kind: output, shape index: {}]
  %s3 = sld [smem:[#allocation0]]
  $region34: #{_mse_pallas.1} parent=0
    _
  %s5 = ssub.s32 1, %s3
  %s6 = scalar_select 0, %s5, %s3
  $region1: #{_mse_pallas.1} parent=0
    #allocation3 [shape = 'u8[8192]{0}', space=vmem, size = 0x2000, scoped, tag = 'input window, operand 0, single buffered']
    #allocation4 [shape = 's32[1]{0}', space=sflag, size = 0x4, scoped, tag = 'scoped memory for _mse_pallas.1']
    #allocation5 [shape = 'u8[8192]{0}', space=vmem, size = 0x2000, scoped, tag = 'input window, operand 1, single buffered']
    #allocation6 [shape = 's32[1]{0}', space=sflag, size = 0x4, scoped, tag = 'scoped memory for _mse_pallas.1']
    %7 = vsyncpa [#allocation4], 0
    %8 = vsyncpa [#allocation6], 0
    // Predicated region
    $region2: #{_mse_pallas.1} parent=1 // pred_check
      _
    $region3: #{_mse_pallas.1} parent=1 // pred_check_branch
      %10 = sbr.rel (0) target = $region5
    $region4: #{_mse_pallas.1} parent=1 // pred_region
      %s11 = sadd.s32 0, 0
      %p12 = scmp.lt.s32.totalorder %s11, 0
      %s13 = scalar_select %p12, %s11, 0
      %s14 = smul.u32 2, %s13
      %s16 = ssub.s32 256, 256
      %17 = vsyncadd [#allocation4], %s16
      %s18 = smul.addr %s14, 128
      %s19 = scalar_lea.hbm %s0, %s18
      %s20 = sshll.u32 [#allocation3], 4
      %s21 = int_to_ptr.vmem [resolvable:$true] %s20
      %26 = dma.hbm_to_vmem [thread:$0]  %s19, 256, %s21, [#allocation4], 128, 128, 8
    $region5: #{_mse_pallas.1} parent=1 // pred_fallthru
      _
    // Predicated region
    $region6: #{_mse_pallas.1} parent=1 // pred_check
      _
    $region7: #{_mse_pallas.1} parent=1 // pred_check_branch
      %28 = sbr.rel (0) target = $region9
    $region8: #{_mse_pallas.1} parent=1 // pred_region
      %s29 = sadd.s32 0, 0
      %p30 = scmp.lt.s32.totalorder %s29, 0
      %s31 = scalar_select %p30, %s29, 0
      %s32 = smul.u32 2, %s31
      %s34 = ssub.s32 256, 256
      %35 = vsyncadd [#allocation6], %s34
      %s36 = smul.addr %s32, 128
      %s37 = scalar_lea.hbm %s1, %s36
      %s38 = sshll.u32 [#allocation5], 4
      %s39 = int_to_ptr.vmem [resolvable:$true] %s38
      %44 = dma.hbm_to_vmem [thread:$0]  %s37, 256, %s39, [#allocation6], 128, 128, 8
    $region9: #{_mse_pallas.1} parent=1 // pred_fallthru
      _
    // Predicated region
    $region10: #{_mse_pallas.1} parent=1 // pred_check
      _
    $region11: #{_mse_pallas.1} parent=1 // pred_check_branch
      %46 = sbr.rel (0) target = $region13
    $region12: #{_mse_pallas.1} parent=1 // pred_region
      %47 = dma.done [#allocation4], 256
    $region13: #{_mse_pallas.1} parent=1 // pred_fallthru
      _
    // Predicated region
    $region14: #{_mse_pallas.1} parent=1 // pred_check
      _
    $region15: #{_mse_pallas.1} parent=1 // pred_check_branch
      %49 = sbr.rel (0) target = $region17
    $region16: #{_mse_pallas.1} parent=1 // pred_region
      %50 = dma.done [#allocation6], 256
    $region17: #{_mse_pallas.1} parent=1 // pred_fallthru
      _
    %s51 = sadd.s32 0, 0
    %p52 = scmp.lt.s32.totalorder %s51, 0
    %s53 = scalar_select %p52, %s51, 0
    %s54 = smul.u32 2, %s53
    %s55 = sadd.s32 0, 0
    %p56 = scmp.lt.s32.totalorder %s55, 0
    %s57 = scalar_select %p56, %s55, 0
    %s58 = smul.u32 2, %s57
    %p59 = scmp.eq.s32.totalorder 0, 0
    // Predicated region
    $region18: #{_mse_pallas.1} parent=1 // pred_check
      %p60 = pneg %p59
    $region19: #{_mse_pallas.1} parent=1 // pred_check_branch
      %62 = sbr.rel (%p60) target = $region21
    $region20: #{_mse_pallas.1} parent=1 // pred_region
      %63 = vst [vmem:[#allocation2] sm:$0xff] 0.0
    $region21: #{_mse_pallas.1} parent=1 // pred_fallthru
      _
    %v64 = vld [vmem:[#allocation3] sm:$0xff]
    %v65 = vld [vmem:[#allocation3 + $0x8] sm:$0xff]
    %v66 = vld [vmem:[#allocation5] sm:$0xff]
    %v67 = vld [vmem:[#allocation5 + $0x8] sm:$0xff]
    %v68 = vsub.f32 %v64, %v66
    %v69 = vsub.f32 %v65, %v67
    %v70 = vmul.f32 %v68, %v68
    %v71 = vmul.f32 %v69, %v69
    %v72 = vld [vmem:[#allocation2] sm:$0xff]
    %v73 = vadd.f32 %v70, %v71
    %v74 = vadd.f32 %v72, %v73
    %75 = vst [vmem:[#allocation2] sm:$0xff] %v74
    // Predicated region
    $region22: #{_mse_pallas.1} parent=1 // pred_check
      %p76 = pneg %p59
    $region23: #{_mse_pallas.1} parent=1 // pred_check_branch
      %78 = sbr.rel (%p76) target = $region25
    $region24: #{_mse_pallas.1} parent=1 // pred_region
      %v79 = vld [vmem:[#allocation2] sm:$0xff]
      %80 = vst [vmem:[%s2] sm:$0xff] %v79
    $region25: #{_mse_pallas.1} parent=1 // pred_fallthru
      _
    // Predicated region
    $region26: #{_mse_pallas.1} parent=1 // pred_check
      _
    $region27: #{_mse_pallas.1} parent=1 // pred_check_branch
      %82 = sbr.rel (0) target = $region29
    $region28: #{_mse_pallas.1} parent=1 // pred_region
      _
    $region29: #{_mse_pallas.1} parent=1 // pred_fallthru
      _
    // Predicated region
    $region30: #{_mse_pallas.1} parent=1 // pred_check
      _
    $region31: #{_mse_pallas.1} parent=1 // pred_check_branch
      %84 = sbr.rel (0) target = $region33
    $region32: #{_mse_pallas.1} parent=1 // pred_region
      _
    $region33: #{_mse_pallas.1} parent=1 // pred_fallthru
      _
    %85 = vsyncpa [#allocation4], 1
    %86 = vsyncpa [#allocation6], 1

</llo_original>
